<compile_context>
chip_gen: v7x
topology: tpu7x:2x2x1
jax: 0.10.0
libtpu: 0.0.40
codegen_flags: <defaults>
</compile_context>

<pallas_src>
import functools

import jax
import jax.numpy as jnp
from jax.experimental import pallas as pl
from jax.experimental.pallas import tpu as pltpu


def _round_up(x, m):
    return (x + m - 1) // m * m


def _sbd_kernel(grids_ref, z_ref, out_ref, *, hw, latent):
    # grids_ref: VMEM (2, HWp)          — x/y coordinate planes (flattened, lane-dense)
    # z_ref    : VMEM (TILE_B, Z)       — latents for this batch tile
    # out_ref  : VMEM (TILE_B, C*HWp)   — flattened output rows for this tile
    tb = out_ref.shape[0]

    grids = grids_ref[...]                            # (2, HWp), one small load per step
    # channels 0 and 1: coordinate planes, sublane-broadcast across the tile
    out_ref[:, pl.ds(0, hw)] = jnp.broadcast_to(grids[0:1, :], (tb, hw))
    out_ref[:, pl.ds(hw, hw)] = jnp.broadcast_to(grids[1:2, :], (tb, hw))

    # channels 2 .. Z+1: each latent column lane-broadcast over its HW span
    zb = z_ref[...]                                   # (TILE_B, Z), single small load
    for c in range(latent):                           # latent is small & static -> unrolled
        out_ref[:, pl.ds((2 + c) * hw, hw)] = jnp.broadcast_to(
            zb[:, c:c + 1], (tb, hw)
        )


def spatial_broadcast_decode(z, im_size=32, tile_b=None):
    """z: (B, Z) float array -> (B, Z+2, im_size, im_size) spatial broadcast."""
    B, Z = z.shape
    C = Z + 2
    H = W = im_size
    HW = H * W
    HWp = _round_up(HW, 128)               # keep every per-channel span lane-aligned
    out_dtype = z.dtype
    itemsize = jnp.dtype(out_dtype).itemsize
    sub = {4: 8, 2: 16, 1: 32}.get(itemsize, 8)   # packed-sublane row multiple

    # Precompute coordinate planes (analog of the PyTorch register_buffer).
    lin = jnp.linspace(-1.0, 1.0, im_size)
    x_grid, y_grid = jnp.meshgrid(lin, lin, indexing="ij")
    grids = jnp.stack([x_grid.reshape(HW), y_grid.reshape(HW)], axis=0)
    if HWp != HW:
        grids = jnp.pad(grids, ((0, 0), (0, HWp - HW)))
    grids = grids.astype(out_dtype)                   # (2, HWp), lane-dense

    # Pad batch to a whole (dtype-aware) sublane group; strip after the call.
    Bp = max(_round_up(B, sub), sub)
    z_p = z if Bp == B else jnp.pad(z, ((0, Bp - B), (0, 0)))

    # Generation-aware VMEM budget: big tiles on 128-MiB chips, conservative on v7x.
    try:
        vmem_cap = int(getattr(pltpu.get_tpu_info(), "vmem_capacity_bytes", 64 << 20))
    except Exception:
        vmem_cap = 64 << 20
    if vmem_cap >= (100 << 20):            # v5e / v6e: 128 MiB physical VMEM
        target_bytes, vmem_limit = 16 << 20, 64 << 20
    else:                                  # v7x (64 MiB per TC) or unknown: headroom
        target_bytes, vmem_limit = 8 << 20, 32 << 20

    bytes_per_row = C * HWp * itemsize
    if tile_b is None:
        rows = max(sub, (target_bytes // max(bytes_per_row, 1)) // sub * sub)
        # Guarantee >= 2 grid steps when the batch allows (v7x megacore sharding).
        half_cap = max(sub, _round_up(pl.cdiv(Bp, 2), sub))
        tile_b = min(Bp, rows, half_cap)
    else:
        tile_b = min(Bp, max(sub, _round_up(tile_b, sub)))

    grid = (pl.cdiv(Bp, tile_b),)
    kernel = functools.partial(_sbd_kernel, hw=HWp, latent=Z)

    out_flat = pl.pallas_call(
        kernel,
        out_shape=jax.ShapeDtypeStruct((Bp, C * HWp), out_dtype),
        grid=grid,
        in_specs=[
            # coordinate planes: same tiny (2, HWp) block every grid step
            pl.BlockSpec((2, HWp), lambda i: (0, 0)),
            # latents: per-tile VMEM block
            pl.BlockSpec((tile_b, Z), lambda i: (i, 0)),
        ],
        out_specs=pl.BlockSpec((tile_b, C * HWp), lambda i: (i, 0)),
        compiler_params=pltpu.CompilerParams(
            dimension_semantics=("parallel",),
            vmem_limit_bytes=vmem_limit,
        ),
    )(grids, z_p)

    # Strip batch padding and HW lane padding; reshape back to NCHW (free metadata).
    out = out_flat[:B].reshape(B, C, HWp)[:, :, :HW].reshape(B, C, H, W)
    return out


def _reference(z, im_size):
    """Pure-JAX reference matching the PyTorch forward."""
    B, Z = z.shape
    lin = jnp.linspace(-1.0, 1.0, im_size)
    x_grid, y_grid = jnp.meshgrid(lin, lin, indexing="ij")
    xg = jnp.broadcast_to(x_grid[None, None], (B, 1, im_size, im_size))
    yg = jnp.broadcast_to(y_grid[None, None], (B, 1, im_size, im_size))
    zb = jnp.broadcast_to(z[:, :, None, None], (B, Z, im_size, im_size))
    return jnp.concatenate([xg, yg, zb], axis=1)


if __name__ == "__main__":
    key0, key1 = jax.random.split(jax.random.PRNGKey(0))

    # Small shapes consistent with the module.
    B, Z, im_size = 2, 4, 16
    z = jax.random.normal(key0, (B, Z), dtype=jnp.float32)
    out = jax.block_until_ready(spatial_broadcast_decode(z, im_size=im_size))
    ref = _reference(z, im_size)
    assert out.shape == (B, Z + 2, im_size, im_size), out.shape
    assert jnp.allclose(out, ref, atol=1e-6), float(jnp.abs(out - ref).max())

    # Module default im_size=32 with a multi-step batched grid (explicit tile_b).
    B2 = 16
    z2 = jax.random.normal(key1, (B2, Z), dtype=jnp.float32)
    out2 = jax.block_until_ready(spatial_broadcast_decode(z2, im_size=32, tile_b=8))
    ref2 = _reference(z2, 32)
    assert out2.shape == (B2, Z + 2, 32, 32), out2.shape
    assert jnp.allclose(out2, ref2, atol=1e-6), float(jnp.abs(out2 - ref2).max())

    # Default tile_b path (exercises the >=2-step grid cap) at im_size=32.
    out3 = jax.block_until_ready(spatial_broadcast_decode(z2, im_size=32))
    assert jnp.allclose(out3, ref2, atol=1e-6), float(jnp.abs(out3 - ref2).max())

    print("KERNEL_OK")
</pallas_src>

<mosaic_0001>
module attributes {stable_mosaic.version = 11 : i64} {
  func.func @_sbd_kernel(%arg0: i32, %arg1: memref<2x256xf32, #tpu.memory_space<vmem>>, %arg2: memref<8x4xf32, #tpu.memory_space<vmem>>, %arg3: memref<8x1536xf32, #tpu.memory_space<vmem>>) attributes {dimension_semantics = [#tpu.dimension_semantics<parallel>], iteration_bounds = array<i64: 1>, scalar_prefetch = 0 : i64, scratch_operands = 0 : i64, tpu.core_type = #tpu.core_type<tc>, window_params = [{pipeline_mode = #tpu.pipeline_mode<synchronous>, transform_indices = @transform_0, window_bounds = array<i64: 2, 256>}, {transform_indices = @transform_1, window_bounds = array<i64: 8, 4>}, {transform_indices = @transform_2, window_bounds = array<i64: 8, 1536>}]} {
    %c0 = arith.constant 0 : index
    %c0_0 = arith.constant 0 : index
    %0 = vector.load %arg1[%c0, %c0_0] : memref<2x256xf32, #tpu.memory_space<vmem>>, vector<2x256xf32>
    %1 = vector.extract_strided_slice %0 {offsets = [0, 0], sizes = [1, 256], strides = [1, 1]} : vector<2x256xf32> to vector<1x256xf32>
    %2 = vector.shape_cast %1 : vector<1x256xf32> to vector<1x256xf32>
    %3 = vector.broadcast %2 : vector<1x256xf32> to vector<8x256xf32>
    %c0_1 = arith.constant 0 : index
    %c0_2 = arith.constant 0 : index
    %4 = vector.load %arg3[%c0_1, %c0_2] : memref<8x1536xf32, #tpu.memory_space<vmem>>, vector<8x256xf32>
    tpu.vector_store %arg3[%c0_1, %c0_2], %3 {strides = array<i32>} : memref<8x1536xf32, #tpu.memory_space<vmem>>, vector<8x256xf32>,
    %5 = vector.extract_strided_slice %0 {offsets = [1, 0], sizes = [1, 256], strides = [1, 1]} : vector<2x256xf32> to vector<1x256xf32>
    %6 = vector.shape_cast %5 : vector<1x256xf32> to vector<1x256xf32>
    %7 = vector.broadcast %6 : vector<1x256xf32> to vector<8x256xf32>
    %c0_3 = arith.constant 0 : index
    %c256 = arith.constant 256 : index
    %8 = vector.load %arg3[%c0_3, %c256] : memref<8x1536xf32, #tpu.memory_space<vmem>>, vector<8x256xf32>
    tpu.vector_store %arg3[%c0_3, %c256], %7 {strides = array<i32>} : memref<8x1536xf32, #tpu.memory_space<vmem>>, vector<8x256xf32>,
    %c0_4 = arith.constant 0 : index
    %c0_5 = arith.constant 0 : index
    %9 = vector.load %arg2[%c0_4, %c0_5] : memref<8x4xf32, #tpu.memory_space<vmem>>, vector<8x4xf32>
    %10 = vector.extract_strided_slice %9 {offsets = [0, 0], sizes = [8, 1], strides = [1, 1]} : vector<8x4xf32> to vector<8x1xf32>
    %11 = vector.shape_cast %10 : vector<8x1xf32> to vector<8x1xf32>
    %12 = vector.broadcast %11 : vector<8x1xf32> to vector<8x256xf32>
    %c0_6 = arith.constant 0 : index
    %c512 = arith.constant 512 : index
    %13 = vector.load %arg3[%c0_6, %c512] : memref<8x1536xf32, #tpu.memory_space<vmem>>, vector<8x256xf32>
    tpu.vector_store %arg3[%c0_6, %c512], %12 {strides = array<i32>} : memref<8x1536xf32, #tpu.memory_space<vmem>>, vector<8x256xf32>,
    %14 = vector.extract_strided_slice %9 {offsets = [0, 1], sizes = [8, 1], strides = [1, 1]} : vector<8x4xf32> to vector<8x1xf32>
    %15 = vector.shape_cast %14 : vector<8x1xf32> to vector<8x1xf32>
    %16 = vector.broadcast %15 : vector<8x1xf32> to vector<8x256xf32>
    %c0_7 = arith.constant 0 : index
    %c768 = arith.constant 768 : index
    %17 = vector.load %arg3[%c0_7, %c768] : memref<8x1536xf32, #tpu.memory_space<vmem>>, vector<8x256xf32>
    tpu.vector_store %arg3[%c0_7, %c768], %16 {strides = array<i32>} : memref<8x1536xf32, #tpu.memory_space<vmem>>, vector<8x256xf32>,
    %18 = vector.extract_strided_slice %9 {offsets = [0, 2], sizes = [8, 1], strides = [1, 1]} : vector<8x4xf32> to vector<8x1xf32>
    %19 = vector.shape_cast %18 : vector<8x1xf32> to vector<8x1xf32>
    %20 = vector.broadcast %19 : vector<8x1xf32> to vector<8x256xf32>
    %c0_8 = arith.constant 0 : index
    %c1024 = arith.constant 1024 : index
    %21 = vector.load %arg3[%c0_8, %c1024] : memref<8x1536xf32, #tpu.memory_space<vmem>>, vector<8x256xf32>
    tpu.vector_store %arg3[%c0_8, %c1024], %20 {strides = array<i32>} : memref<8x1536xf32, #tpu.memory_space<vmem>>, vector<8x256xf32>,
    %22 = vector.extract_strided_slice %9 {offsets = [0, 3], sizes = [8, 1], strides = [1, 1]} : vector<8x4xf32> to vector<8x1xf32>
    %23 = vector.shape_cast %22 : vector<8x1xf32> to vector<8x1xf32>
    %24 = vector.broadcast %23 : vector<8x1xf32> to vector<8x256xf32>
    %c0_9 = arith.constant 0 : index
    %c1280 = arith.constant 1280 : index
    %25 = vector.load %arg3[%c0_9, %c1280] : memref<8x1536xf32, #tpu.memory_space<vmem>>, vector<8x256xf32>
    tpu.vector_store %arg3[%c0_9, %c1280], %24 {strides = array<i32>} : memref<8x1536xf32, #tpu.memory_space<vmem>>, vector<8x256xf32>,
    return
  }
  func.func @transform_0(%arg0: i32) -> (i32, i32) {
    %c0_i32 = arith.constant 0 : i32
    %c0_i32_0 = arith.constant 0 : i32
    %c0_i32_1 = arith.constant 0 : i32
    return %c0_i32, %c0_i32_0 : i32, i32
  }
  func.func @transform_1(%arg0: i32) -> (i32, i32) {
    %c0_i32 = arith.constant 0 : i32
    %c0_i32_0 = arith.constant 0 : i32
    return %arg0, %c0_i32 : i32, i32
  }
  func.func @transform_2(%arg0: i32) -> (i32, i32) {
    %c0_i32 = arith.constant 0 : i32
    %c0_i32_0 = arith.constant 0 : i32
    return %arg0, %c0_i32 : i32, i32
  }
}

</mosaic_0001>

<llo_original>
// kernel: tpu_custom_call.1
$region0: #{tpu_custom_call.1}
  #allocation0 [shape = 'u32[]', space=smem, size = 0x4, offset = 0x4, fixed_abs, tag = 'smem constant byte address 0x4 - core index']
  #allocation1 [shape = 'u32[144,128]{1,0:T(1,128)}', space=vmem, size = 0x12000, scoped, tag = 'internal scratch']
  %s0 = inlined_call_operand.vmem [shape: f32[2,256], index: 0, kind: input, shape index: {}]
  %s1 = inlined_call_operand.vmem [shape: f32[8,4], index: 1, kind: input, shape index: {}]
  %s2 = inlined_call_operand.hbm [shape: f32[8,1536], index: 2, kind: output, shape index: {}]
  %s3 = sld [smem:[#allocation0]]
  $region18: #{tpu_custom_call.1} parent=0
    _
  %s5 = ssub.s32 1, %s3
  %s6 = scalar_select 0, %s5, %s3
  $region1: #{tpu_custom_call.1} parent=0
    #allocation2 [shape = 'u8[49152]{0}', space=vmem, size = 0xc000, scoped, tag = 'output window, operand 0, single buffered']
    #allocation3 [shape = 's32[1]{0}', space=sflag, size = 0x4, scoped, tag = 'scoped memory for tpu_custom_call.1']
    %7 = vsyncpa [#allocation3], 0
    // Predicated region
    $region2: #{tpu_custom_call.1} parent=1 // pred_check
      _
    $region3: #{tpu_custom_call.1} parent=1 // pred_check_branch
      %9 = sbr.rel (0) target = $region5
    $region4: #{tpu_custom_call.1} parent=1 // pred_region
      _
    $region5: #{tpu_custom_call.1} parent=1 // pred_fallthru
      _
    // Predicated region
    $region6: #{tpu_custom_call.1} parent=1 // pred_check
      _
    $region7: #{tpu_custom_call.1} parent=1 // pred_check_branch
      %11 = sbr.rel (0) target = $region9
    $region8: #{tpu_custom_call.1} parent=1 // pred_region
      _
    $region9: #{tpu_custom_call.1} parent=1 // pred_fallthru
      _
    %v12 = vld [vmem:[%s0] sm:$0xf]
    %v14 = vlaneseq
    %v15 = vshrl.u32 %v14, 7
    %v16 = vsub.s32 0, %v15
    %v17 = vrot.slane %v12, %v16
    %v18 = vlaneseq
    %v19 = vshrl.u32 %v18, 7
    %v20 = vsub.s32 2, %v19
    %v21 = vrot.slane %v12, %v20
    %v24 = vlaneseq
    %v25 = vshrl.u32 %v24, 7
    %v26 = vsub.s32 0, %v25
    %v27 = vrot.slane %v17, %v26
    %v28 = vlaneseq
    %v29 = vshrl.u32 %v28, 7
    %v30 = vsub.s32 0, %v29
    %v31 = vrot.slane %v21, %v30
    %32 = vst [vmem:[#allocation2] sm:$0xff] %v27
    %33 = vst [vmem:[#allocation2 + $0x8] sm:$0xff] %v31
    %v34 = vlaneseq
    %v35 = vshrl.u32 %v34, 7
    %v36 = vsub.s32 1, %v35
    %v37 = vrot.slane %v12, %v36
    %v38 = vlaneseq
    %v39 = vshrl.u32 %v38, 7
    %v40 = vsub.s32 3, %v39
    %v41 = vrot.slane %v12, %v40
    %v44 = vlaneseq
    %v45 = vshrl.u32 %v44, 7
    %v46 = vsub.s32 1, %v45
    %v47 = vrot.slane %v37, %v46
    %v48 = vlaneseq
    %v49 = vshrl.u32 %v48, 7
    %v50 = vsub.s32 1, %v49
    %v51 = vrot.slane %v41, %v50
    %52 = vst [vmem:[#allocation2 + $0x10] sm:$0xff] %v47
    %53 = vst [vmem:[#allocation2 + $0x18] sm:$0xff] %v51
    %v54 = vld [vmem:[%s1] sm:$0xff]
    %56 = vset.pattern.permute.xlu0 0
    %57 = vperm.xlu0 %56, %v54
    %v58 = vpop.permute.xlu0 %57
    %60 = vst [vmem:[#allocation2 + $0x20] sm:$0xff] %v58
    %61 = vst [vmem:[#allocation2 + $0x28] sm:$0xff] %v58
    %62 = vset.pattern.permute.xlu0 1
    %63 = vperm.xlu0 %62, %v54
    %v64 = vpop.permute.xlu0 %63
    %66 = vst [vmem:[#allocation2 + $0x30] sm:$0xff] %v64
    %67 = vst [vmem:[#allocation2 + $0x38] sm:$0xff] %v64
    %68 = vset.pattern.permute.xlu0 2
    %69 = vperm.xlu0 %68, %v54
    %v70 = vpop.permute.xlu0 %69
    %72 = vst [vmem:[#allocation2 + $0x40] sm:$0xff] %v70
    %73 = vst [vmem:[#allocation2 + $0x48] sm:$0xff] %v70
    %74 = vset.pattern.permute.xlu0 3
    %75 = vperm.xlu0 %74, %v54
    %v76 = vpop.permute.xlu0 %75
    %78 = vst [vmem:[#allocation2 + $0x50] sm:$0xff] %v76
    %79 = vst [vmem:[#allocation2 + $0x58] sm:$0xff] %v76
    // Predicated region
    $region10: #{tpu_custom_call.1} parent=1 // pred_check
      _
    $region11: #{tpu_custom_call.1} parent=1 // pred_check_branch
      %81 = sbr.rel (0) target = $region13
    $region12: #{tpu_custom_call.1} parent=1 // pred_region
      %s83 = ssub.s32 1536, 1536
      %84 = vsyncadd [#allocation3], %s83
      %s86 = sshll.u32 [#allocation2], 4
      %s87 = int_to_ptr.vmem [resolvable:$true] %s86
      %89 = dma.vmem_to_hbm [thread:$0]  %s87, 1536, %s2, [#allocation3]
    $region13: #{tpu_custom_call.1} parent=1 // pred_fallthru
      _
    // Predicated region
    $region14: #{tpu_custom_call.1} parent=1 // pred_check
      _
    $region15: #{tpu_custom_call.1} parent=1 // pred_check_branch
      %91 = sbr.rel (0) target = $region17
    $region16: #{tpu_custom_call.1} parent=1 // pred_region
      %92 = dma.done [#allocation3], 1536
    $region17: #{tpu_custom_call.1} parent=1 // pred_fallthru
      _
    %93 = vsyncpa [#allocation3], 1

</llo_original>
